<compile_context>
chip_gen: v7x
topology: tpu7x:2x2x1
jax: 0.10.0
libtpu: 0.0.40
codegen_flags: <defaults>
</compile_context>

<pallas_src>
import jax
import jax.numpy as jnp
from jax.experimental import pallas as pl
from jax.experimental.pallas import tpu as pltpu

N_EMBD = 192
HIDDEN = 4 * N_EMBD   # 768
DROPOUT_P = 0.2       # unused at inference time


def ffn_kernel(x_ref, w1_ref, b1_ref, w2_ref, b2_ref, o_ref):
    # x_ref: (tm, C) f32, w1_ref: (C, H) bf16, b1_ref: (1, H) f32,
    # w2_ref: (H, C) bf16, b2_ref: (1, C) f32, o_ref: (tm, C) f32/bf16
    # Cast activations to bf16 in-kernel (avoids an extra HBM pass outside).
    x = x_ref[...].astype(jnp.bfloat16)
    # First matmul: bf16 inputs, fp32 accumulation on the MXU.
    h = jnp.dot(x, w1_ref[...], preferred_element_type=jnp.float32)
    # Bias + ReLU in fp32 (VPU fp32 path works on every generation).
    h = jnp.maximum(h + b1_ref[...], 0.0)
    # Second matmul: activations back to bf16, accumulate in fp32.
    y = jnp.dot(h.astype(jnp.bfloat16), w2_ref[...],
                preferred_element_type=jnp.float32)
    y = y + b2_ref[...]
    # Dropout in eval mode == identity.
    o_ref[...] = y.astype(o_ref.dtype)


def _pick_tm(M, tm_max=1024):
    """Row-tile heuristic: big enough to amortize per-step overhead, small
    enough to keep >= 2 grid tiles for mid-size M (v7x has 2 TensorCores)."""
    if M <= 256:
        return M                      # single full-extent tile (always legal)
    half = -(-M // 2)                 # ceil(M / 2)
    tm = ((half + 255) // 256) * 256  # round up to a multiple of 256
    return min(tm_max, tm)


def feed_forward(x, w1, b1, w2, b2, *, tm=None, out_dtype=None):
    """x: (B, T, C) float32 -> (B, T, C) out_dtype (default: x.dtype).

    tm: row tile over the flattened (B*T, C) input. Default: adaptive
    (<= 1024, multiple of 256, >= 2 tiles when M > 256). The last grid tile
    may be ragged; Pallas drops out-of-bounds writes so no padding copy is
    needed.
    """
    B, T, C = x.shape
    assert C == N_EMBD
    M = B * T
    if out_dtype is None:
        out_dtype = x.dtype
    if tm is None:
        tm = _pick_tm(M)
    num_tiles = pl.cdiv(M, tm)

    # Keep x in fp32 here; the bf16 cast happens inside the kernel.
    x2d = x.reshape(M, C)
    w1_bf = w1.astype(jnp.bfloat16)
    w2_bf = w2.astype(jnp.bfloat16)
    b1_2d = b1.reshape(1, HIDDEN).astype(jnp.float32)
    b2_2d = b2.reshape(1, C).astype(jnp.float32)

    flops = 4 * M * C * HIDDEN  # two matmuls, 2*M*C*H each
    bytes_accessed = (
        M * C * x2d.dtype.itemsize                    # read x
        + M * C * jnp.dtype(out_dtype).itemsize       # write out
        + (C * HIDDEN + HIDDEN * C) * 2               # bf16 weights
        + (HIDDEN + C) * 4                            # fp32 biases
    )

    out = pl.pallas_call(
        ffn_kernel,
        out_shape=jax.ShapeDtypeStruct((M, C), out_dtype),
        grid_spec=pltpu.PrefetchScalarGridSpec(
            num_scalar_prefetch=0,
            grid=(num_tiles,),
            in_specs=[
                pl.BlockSpec((tm, C), lambda i: (i, 0)),       # x rows tile
                pl.BlockSpec((C, HIDDEN), lambda i: (0, 0)),   # W1 (resident)
                pl.BlockSpec((1, HIDDEN), lambda i: (0, 0)),   # b1
                pl.BlockSpec((HIDDEN, C), lambda i: (0, 0)),   # W2 (resident)
                pl.BlockSpec((1, C), lambda i: (0, 0)),        # b2
            ],
            out_specs=pl.BlockSpec((tm, C), lambda i: (i, 0)),
        ),
        compiler_params=pltpu.CompilerParams(
            dimension_semantics=("parallel",),   # row tiles independent -> megacore
            vmem_limit_bytes=32 * 1024 * 1024,
        ),
        cost_estimate=pl.CostEstimate(
            flops=int(flops), transcendentals=0,
            bytes_accessed=int(bytes_accessed)),
    )(x2d, w1_bf, b1_2d, w2_bf, b2_2d)

    return out.reshape(B, T, C)


def init_params(key):
    """Deterministic init mimicking nn.Linear default (U(-1/sqrt(fan_in), 1/sqrt(fan_in)))."""
    k1, k2, k3, k4 = jax.random.split(key, 4)
    bound1 = 1.0 / (N_EMBD ** 0.5)
    bound2 = 1.0 / (HIDDEN ** 0.5)
    w1 = jax.random.uniform(k1, (N_EMBD, HIDDEN), jnp.float32, -bound1, bound1)
    b1 = jax.random.uniform(k2, (HIDDEN,), jnp.float32, -bound1, bound1)
    w2 = jax.random.uniform(k3, (HIDDEN, N_EMBD), jnp.float32, -bound2, bound2)
    b2 = jax.random.uniform(k4, (N_EMBD,), jnp.float32, -bound2, bound2)
    return w1, b1, w2, b2


def _reference(x, w1, b1, w2, b2):
    return jnp.maximum(x @ w1 + b1, 0.0) @ w2 + b2


if __name__ == "__main__":
    key = jax.random.PRNGKey(0)
    kx, kx2, kp = jax.random.split(key, 3)
    w1, b1, w2, b2 = init_params(kp)

    # Small shape (single full-extent tile path).
    B, T = 2, 8
    x = jax.random.normal(kx, (B, T, N_EMBD), jnp.float32)
    y = feed_forward(x, w1, b1, w2, b2)
    jax.block_until_ready(y)
    ref = _reference(x, w1, b1, w2, b2)
    assert y.shape == (B, T, N_EMBD)
    # bf16 matmul inputs with fp32 accumulation -> ~1e-2 relative error vs fp32.
    assert jnp.allclose(y, ref, atol=5e-2, rtol=5e-2), (
        float(jnp.max(jnp.abs(y - ref))))

    # Larger shape exercising multi-tile grid + ragged last block (M=400 -> tm=256, 2 tiles).
    B2, T2 = 2, 200
    x2 = jax.random.normal(kx2, (B2, T2, N_EMBD), jnp.float32)
    y2 = feed_forward(x2, w1, b1, w2, b2)
    jax.block_until_ready(y2)
    ref2 = _reference(x2, w1, b1, w2, b2)
    assert y2.shape == (B2, T2, N_EMBD)
    assert jnp.allclose(y2, ref2, atol=5e-2, rtol=5e-2), (
        float(jnp.max(jnp.abs(y2 - ref2))))

    print("KERNEL_OK")
</pallas_src>

<mosaic_0001>
module attributes {stable_mosaic.version = 11 : i64} {
  func.func @ffn_kernel(%arg0: i32, %arg1: memref<16x192xf32, #tpu.memory_space<vmem>>, %arg2: memref<192x768xbf16, #tpu.memory_space<vmem>>, %arg3: memref<1x768xf32, #tpu.memory_space<vmem>>, %arg4: memref<768x192xbf16, #tpu.memory_space<vmem>>, %arg5: memref<1x192xf32, #tpu.memory_space<vmem>>, %arg6: memref<16x192xf32, #tpu.memory_space<vmem>>) attributes {dimension_semantics = [#tpu.dimension_semantics<parallel>], iteration_bounds = array<i64: 1>, scalar_prefetch = 0 : i64, scratch_operands = 0 : i64, tpu.core_type = #tpu.core_type<tc>, window_params = [{transform_indices = @transform_0, window_bounds = array<i64: 16, 192>}, {pipeline_mode = #tpu.pipeline_mode<synchronous>, transform_indices = @transform_1, window_bounds = array<i64: 192, 768>}, {pipeline_mode = #tpu.pipeline_mode<synchronous>, transform_indices = @transform_2, window_bounds = array<i64: 1, 768>}, {pipeline_mode = #tpu.pipeline_mode<synchronous>, transform_indices = @transform_3, window_bounds = array<i64: 768, 192>}, {pipeline_mode = #tpu.pipeline_mode<synchronous>, transform_indices = @transform_4, window_bounds = array<i64: 1, 192>}, {transform_indices = @transform_5, window_bounds = array<i64: 16, 192>}]} {
    %c0 = arith.constant 0 : index
    %c0_0 = arith.constant 0 : index
    %0 = vector.load %arg1[%c0, %c0_0] : memref<16x192xf32, #tpu.memory_space<vmem>>, vector<16x192xf32>
    %1 = arith.truncf %0 : vector<16x192xf32> to vector<16x192xbf16>
    %c0_1 = arith.constant 0 : index
    %c0_2 = arith.constant 0 : index
    %2 = vector.load %arg2[%c0_1, %c0_2] : memref<192x768xbf16, #tpu.memory_space<vmem>>, vector<192x768xbf16>
    %cst = arith.constant dense<0.000000e+00> : vector<16x768xf32>
    %3 = tpu.matmul %1, %2, %cst {dimension_numbers = #tpu.dot_dimension_numbers<[1], [0], [0], [1], [0, 0, 1, 1], [], []>} : vector<16x192xbf16>, vector<192x768xbf16>, vector<16x768xf32> -> vector<16x768xf32>
    %c0_3 = arith.constant 0 : index
    %c0_4 = arith.constant 0 : index
    %4 = vector.load %arg3[%c0_3, %c0_4] : memref<1x768xf32, #tpu.memory_space<vmem>>, vector<1x768xf32>
    %5 = vector.broadcast %4 : vector<1x768xf32> to vector<16x768xf32>
    %6 = arith.addf %3, %5 : vector<16x768xf32>
    %cst_5 = arith.constant 0.000000e+00 : f32
    %7 = vector.broadcast %cst_5 : f32 to vector<16x768xf32>
    %8 = arith.maximumf %6, %7 : vector<16x768xf32>
    %9 = arith.truncf %8 : vector<16x768xf32> to vector<16x768xbf16>
    %c0_6 = arith.constant 0 : index
    %c0_7 = arith.constant 0 : index
    %10 = vector.load %arg4[%c0_6, %c0_7] : memref<768x192xbf16, #tpu.memory_space<vmem>>, vector<768x192xbf16>
    %cst_8 = arith.constant dense<0.000000e+00> : vector<16x192xf32>
    %11 = tpu.matmul %9, %10, %cst_8 {dimension_numbers = #tpu.dot_dimension_numbers<[1], [0], [0], [1], [0, 0, 1, 1], [], []>} : vector<16x768xbf16>, vector<768x192xbf16>, vector<16x192xf32> -> vector<16x192xf32>
    %c0_9 = arith.constant 0 : index
    %c0_10 = arith.constant 0 : index
    %12 = vector.load %arg5[%c0_9, %c0_10] : memref<1x192xf32, #tpu.memory_space<vmem>>, vector<1x192xf32>
    %13 = vector.broadcast %12 : vector<1x192xf32> to vector<16x192xf32>
    %14 = arith.addf %11, %13 : vector<16x192xf32>
    %c0_11 = arith.constant 0 : index
    %c0_12 = arith.constant 0 : index
    %15 = vector.load %arg6[%c0_11, %c0_12] : memref<16x192xf32, #tpu.memory_space<vmem>>, vector<16x192xf32>
    tpu.vector_store %arg6[%c0_11, %c0_12], %14 {strides = array<i32>} : memref<16x192xf32, #tpu.memory_space<vmem>>, vector<16x192xf32>,
    return
  }
  func.func @transform_0(%arg0: i32) -> (i32, i32) {
    %c0_i32 = arith.constant 0 : i32
    %c0_i32_0 = arith.constant 0 : i32
    return %arg0, %c0_i32 : i32, i32
  }
  func.func @transform_1(%arg0: i32) -> (i32, i32) {
    %c0_i32 = arith.constant 0 : i32
    %c0_i32_0 = arith.constant 0 : i32
    %c0_i32_1 = arith.constant 0 : i32
    return %c0_i32, %c0_i32_0 : i32, i32
  }
  func.func @transform_2(%arg0: i32) -> (i32, i32) {
    %c0_i32 = arith.constant 0 : i32
    %c0_i32_0 = arith.constant 0 : i32
    %c0_i32_1 = arith.constant 0 : i32
    return %c0_i32, %c0_i32_0 : i32, i32
  }
  func.func @transform_3(%arg0: i32) -> (i32, i32) {
    %c0_i32 = arith.constant 0 : i32
    %c0_i32_0 = arith.constant 0 : i32
    %c0_i32_1 = arith.constant 0 : i32
    return %c0_i32, %c0_i32_0 : i32, i32
  }
  func.func @transform_4(%arg0: i32) -> (i32, i32) {
    %c0_i32 = arith.constant 0 : i32
    %c0_i32_0 = arith.constant 0 : i32
    %c0_i32_1 = arith.constant 0 : i32
    return %c0_i32, %c0_i32_0 : i32, i32
  }
  func.func @transform_5(%arg0: i32) -> (i32, i32) {
    %c0_i32 = arith.constant 0 : i32
    %c0_i32_0 = arith.constant 0 : i32
    return %arg0, %c0_i32 : i32, i32
  }
}

</mosaic_0001>

<llo_original>
// kernel: tpu_custom_call.1
$region0: #{tpu_custom_call.1}
  #allocation0 [shape = 'u32[]', space=smem, size = 0x4, offset = 0x4, fixed_abs, tag = 'smem constant byte address 0x4 - core index']
  #allocation1 [shape = 'u32[144,128]{1,0:T(1,128)}', space=vmem, size = 0x12000, scoped, tag = 'internal scratch']
  %s0 = inlined_call_operand.vmem [shape: f32[16,192], index: 0, kind: input, shape index: {}]
  %s1 = inlined_call_operand.vmem [shape: bf16[192,768], index: 1, kind: input, shape index: {}]
  %s2 = inlined_call_operand.vmem [shape: f32[1,768], index: 2, kind: input, shape index: {}]
  %s3 = inlined_call_operand.vmem [shape: bf16[768,192], index: 3, kind: input, shape index: {}]
  %s4 = inlined_call_operand.vmem [shape: f32[1,192], index: 4, kind: input, shape index: {}]
  %s5 = inlined_call_operand.hbm [shape: f32[16,192], index: 5, kind: output, shape index: {}]
  %s6 = sld [smem:[#allocation0]]
  $region30: #{tpu_custom_call.1} parent=0
    _
  %s8 = ssub.s32 1, %s6
  %s9 = scalar_select 0, %s8, %s6
  $region1: #{tpu_custom_call.1} parent=0
    #allocation2 [shape = 'u8[16384]{0}', space=vmem, size = 0x4000, scoped, tag = 'output window, operand 0, single buffered']
    #allocation3 [shape = 's32[1]{0}', space=sflag, size = 0x4, scoped, tag = 'scoped memory for tpu_custom_call.1']
    %10 = vsyncpa [#allocation3], 0
    // Predicated region
    $region2: #{tpu_custom_call.1} parent=1 // pred_check
      _
    $region3: #{tpu_custom_call.1} parent=1 // pred_check_branch
      %12 = sbr.rel (0) target = $region5
    $region4: #{tpu_custom_call.1} parent=1 // pred_region
      _
    $region5: #{tpu_custom_call.1} parent=1 // pred_fallthru
      _
    // Predicated region
    $region6: #{tpu_custom_call.1} parent=1 // pred_check
      _
    $region7: #{tpu_custom_call.1} parent=1 // pred_check_branch
      %14 = sbr.rel (0) target = $region9
    $region8: #{tpu_custom_call.1} parent=1 // pred_region
      _
    $region9: #{tpu_custom_call.1} parent=1 // pred_fallthru
      _
    // Predicated region
    $region10: #{tpu_custom_call.1} parent=1 // pred_check
      _
    $region11: #{tpu_custom_call.1} parent=1 // pred_check_branch
      %16 = sbr.rel (0) target = $region13
    $region12: #{tpu_custom_call.1} parent=1 // pred_region
      _
    $region13: #{tpu_custom_call.1} parent=1 // pred_fallthru
      _
    // Predicated region
    $region14: #{tpu_custom_call.1} parent=1 // pred_check
      _
    $region15: #{tpu_custom_call.1} parent=1 // pred_check_branch
      %18 = sbr.rel (0) target = $region17
    $region16: #{tpu_custom_call.1} parent=1 // pred_region
      _
    $region17: #{tpu_custom_call.1} parent=1 // pred_fallthru
      _
    // Predicated region
    $region18: #{tpu_custom_call.1} parent=1 // pred_check
      _
    $region19: #{tpu_custom_call.1} parent=1 // pred_check_branch
      %20 = sbr.rel (0) target = $region21
    $region20: #{tpu_custom_call.1} parent=1 // pred_region
      _
    $region21: #{tpu_custom_call.1} parent=1 // pred_fallthru
      _
    %v22 = vld [vmem:[%s0] sm:$0xff]
    %v23 = vld [vmem:[%s0 + $0x8] sm:$0xff]
    %v24 = vld [vmem:[%s0 + $0x10] sm:$0xff]
    %v25 = vld [vmem:[%s0 + $0x18] sm:$0xff]
    %v26 = vpack.c.bf16 %v24, %v22
    %v27 = vpack.c.bf16 %v25, %v23
    %v28 = vld [vmem:[%s1] sm:$0xff]
    %v29 = vld [vmem:[%s1 + $0x8] sm:$0xff]
    %v30 = vld [vmem:[%s1 + $0x10] sm:$0xff]
    %v31 = vld [vmem:[%s1 + $0x18] sm:$0xff]
    %v32 = vld [vmem:[%s1 + $0x20] sm:$0xff]
    %v33 = vld [vmem:[%s1 + $0x28] sm:$0xff]
    %v34 = vld [vmem:[%s1 + $0x30] sm:$0xff]
    %v35 = vld [vmem:[%s1 + $0x38] sm:$0xff]
    %v36 = vld [vmem:[%s1 + $0x40] sm:$0xff]
    %v37 = vld [vmem:[%s1 + $0x48] sm:$0xff]
    %v38 = vld [vmem:[%s1 + $0x50] sm:$0xff]
    %v39 = vld [vmem:[%s1 + $0x58] sm:$0xff]
    %v40 = vld [vmem:[%s1 + $0x60] sm:$0xff]
    %v41 = vld [vmem:[%s1 + $0x68] sm:$0xff]
    %v42 = vld [vmem:[%s1 + $0x70] sm:$0xff]
    %v43 = vld [vmem:[%s1 + $0x78] sm:$0xff]
    %v44 = vld [vmem:[%s1 + $0x80] sm:$0xff]
    %v45 = vld [vmem:[%s1 + $0x88] sm:$0xff]
    %v46 = vld [vmem:[%s1 + $0x90] sm:$0xff]
    %v47 = vld [vmem:[%s1 + $0x98] sm:$0xff]
    %v48 = vld [vmem:[%s1 + $0xa0] sm:$0xff]
    %v49 = vld [vmem:[%s1 + $0xa8] sm:$0xff]
    %v50 = vld [vmem:[%s1 + $0xb0] sm:$0xff]
    %v51 = vld [vmem:[%s1 + $0xb8] sm:$0xff]
    %v52 = vld [vmem:[%s1 + $0xc0] sm:$0xff]
    %v53 = vld [vmem:[%s1 + $0xc8] sm:$0xff]
    %v54 = vld [vmem:[%s1 + $0xd0] sm:$0xff]
    %v55 = vld [vmem:[%s1 + $0xd8] sm:$0xff]
    %v56 = vld [vmem:[%s1 + $0xe0] sm:$0xff]
    %v57 = vld [vmem:[%s1 + $0xe8] sm:$0xff]
    %v58 = vld [vmem:[%s1 + $0xf0] sm:$0xff]
    %v59 = vld [vmem:[%s1 + $0xf8] sm:$0xff]
    %v60 = vld [vmem:[%s1 + $0x100] sm:$0xff]
    %v61 = vld [vmem:[%s1 + $0x108] sm:$0xff]
    %v62 = vld [vmem:[%s1 + $0x110] sm:$0xff]
    %v63 = vld [vmem:[%s1 + $0x118] sm:$0xff]
    %v64 = vld [vmem:[%s1 + $0x120] sm:$0xff]
    %v65 = vld [vmem:[%s1 + $0x128] sm:$0xff]
    %v66 = vld [vmem:[%s1 + $0x130] sm:$0xff]
    %v67 = vld [vmem:[%s1 + $0x138] sm:$0xff]
    %v68 = vld [vmem:[%s1 + $0x140] sm:$0xff]
    %v69 = vld [vmem:[%s1 + $0x148] sm:$0xff]
    %v70 = vld [vmem:[%s1 + $0x150] sm:$0xff]
    %v71 = vld [vmem:[%s1 + $0x158] sm:$0xff]
    %v72 = vld [vmem:[%s1 + $0x160] sm:$0xff]
    %v73 = vld [vmem:[%s1 + $0x168] sm:$0xff]
    %v74 = vld [vmem:[%s1 + $0x170] sm:$0xff]
    %v75 = vld [vmem:[%s1 + $0x178] sm:$0xff]
    %v76 = vld [vmem:[%s1 + $0x180] sm:$0xff]
    %v77 = vld [vmem:[%s1 + $0x188] sm:$0xff]
    %v78 = vld [vmem:[%s1 + $0x190] sm:$0xff]
    %v79 = vld [vmem:[%s1 + $0x198] sm:$0xff]
    %v80 = vld [vmem:[%s1 + $0x1a0] sm:$0xff]
    %v81 = vld [vmem:[%s1 + $0x1a8] sm:$0xff]
    %v82 = vld [vmem:[%s1 + $0x1b0] sm:$0xff]
    %v83 = vld [vmem:[%s1 + $0x1b8] sm:$0xff]
    %v84 = vld [vmem:[%s1 + $0x1c0] sm:$0xff]
    %v85 = vld [vmem:[%s1 + $0x1c8] sm:$0xff]
    %v86 = vld [vmem:[%s1 + $0x1d0] sm:$0xff]
    %v87 = vld [vmem:[%s1 + $0x1d8] sm:$0xff]
    %v88 = vld [vmem:[%s1 + $0x1e0] sm:$0xff]
    %v89 = vld [vmem:[%s1 + $0x1e8] sm:$0xff]
    %v90 = vld [vmem:[%s1 + $0x1f0] sm:$0xff]
    %v91 = vld [vmem:[%s1 + $0x1f8] sm:$0xff]
    %v92 = vld [vmem:[%s1 + $0x200] sm:$0xff]
    %v93 = vld [vmem:[%s1 + $0x208] sm:$0xff]
    %v94 = vld [vmem:[%s1 + $0x210] sm:$0xff]
    %v95 = vld [vmem:[%s1 + $0x218] sm:$0xff]
    %v96 = vld [vmem:[%s1 + $0x220] sm:$0xff]
    %v97 = vld [vmem:[%s1 + $0x228] sm:$0xff]
    %v98 = vld [vmem:[%s1 + $0x230] sm:$0xff]
    %v99 = vld [vmem:[%s1 + $0x238] sm:$0xff]
    %v100 = vld [vmem:[%s2] sm:$0x3f]
    %v102 = vlaneseq
    %v103 = vshrl.u32 %v102, 7
    %v104 = vsub.s32 0, %v103
    %v105 = vrot.slane %v100, %v104
    %v106 = vlaneseq
    %v107 = vshrl.u32 %v106, 7
    %v108 = vsub.s32 1, %v107
    %v109 = vrot.slane %v100, %v108
    %v110 = vlaneseq
    %v111 = vshrl.u32 %v110, 7
    %v112 = vsub.s32 2, %v111
    %v113 = vrot.slane %v100, %v112
    %v114 = vlaneseq
    %v115 = vshrl.u32 %v114, 7
    %v116 = vsub.s32 3, %v115
    %v117 = vrot.slane %v100, %v116
    %v118 = vlaneseq
    %v119 = vshrl.u32 %v118, 7
    %v120 = vsub.s32 4, %v119
    %v121 = vrot.slane %v100, %v120
    %v122 = vlaneseq
    %v123 = vshrl.u32 %v122, 7
    %v124 = vsub.s32 5, %v123
    %v125 = vrot.slane %v100, %v124
    %v204 = vunpack.c.l.b16 %v28
    %v205 = vunpack.c.h.b16 %v28
    %v206 = vunpack.c.l.b16 %v29
    %v207 = vunpack.c.h.b16 %v29
    %v208 = vunpack.c.l.b16 %v30
    %v209 = vunpack.c.h.b16 %v30
    %v210 = vunpack.c.l.b16 %v31
    %v211 = vunpack.c.h.b16 %v31
    %v212 = vunpack.c.l.b16 %v32
    %v213 = vunpack.c.h.b16 %v32
    %v214 = vunpack.c.l.b16 %v33
    %v215 = vunpack.c.h.b16 %v33
    %v216 = vunpack.c.l.b16 %v34
    %v217 = vunpack.c.h.b16 %v34
    %v218 = vunpack.c.l.b16 %v35
    %v219 = vunpack.c.h.b16 %v35
    %v220 = vunpack.c.l.b16 %v36
    %v221 = vunpack.c.h.b16 %v36
    %v222 = vunpack.c.l.b16 %v37
    %v223 = vunpack.c.h.b16 %v37
    %v224 = vunpack.c.l.b16 %v38
    %v225 = vunpack.c.h.b16 %v38
    %v226 = vunpack.c.l.b16 %v39
    %v227 = vunpack.c.h.b16 %v39
    %v228 = vunpack.c.l.b16 %v40
    %v229 = vunpack.c.h.b16 %v40
    %v230 = vunpack.c.l.b16 %v41
    %v231 = vunpack.c.h.b16 %v41
    %v232 = vunpack.c.l.b16 %v42
    %v233 = vunpack.c.h.b16 %v42
    %v234 = vunpack.c.l.b16 %v43
    %v235 = vunpack.c.h.b16 %v43
    %v236 = vunpack.c.l.b16 %v44
    %v237 = vunpack.c.h.b16 %v44
    %v238 = vunpack.c.l.b16 %v45
    %v239 = vunpack.c.h.b16 %v45
    %v240 = vunpack.c.l.b16 %v46
    %v241 = vunpack.c.h.b16 %v46
    %v242 = vunpack.c.l.b16 %v47
    %v243 = vunpack.c.h.b16 %v47
    %v244 = vunpack.c.l.b16 %v48
    %v245 = vunpack.c.h.b16 %v48
    %v246 = vunpack.c.l.b16 %v49
    %v247 = vunpack.c.h.b16 %v49
    %v248 = vunpack.c.l.b16 %v50
    %v249 = vunpack.c.h.b16 %v50
    %v250 = vunpack.c.l.b16 %v51
    %v251 = vunpack.c.h.b16 %v51
    %v252 = vunpack.c.l.b16 %v52
    %v253 = vunpack.c.h.b16 %v52
    %v254 = vunpack.c.l.b16 %v53
    %v255 = vunpack.c.h.b16 %v53
    %v256 = vunpack.c.l.b16 %v54
    %v257 = vunpack.c.h.b16 %v54
    %v258 = vunpack.c.l.b16 %v55
    %v259 = vunpack.c.h.b16 %v55
    %v260 = vunpack.c.l.b16 %v56
    %v261 = vunpack.c.h.b16 %v56
    %v262 = vunpack.c.l.b16 %v57
    %v263 = vunpack.c.h.b16 %v57
    %v264 = vunpack.c.l.b16 %v58
    %v265 = vunpack.c.h.b16 %v58
    %v266 = vunpack.c.l.b16 %v59
    %v267 = vunpack.c.h.b16 %v59
    %v268 = vunpack.c.l.b16 %v60
    %v269 = vunpack.c.h.b16 %v60
    %v270 = vunpack.c.l.b16 %v61
    %v271 = vunpack.c.h.b16 %v61
    %v272 = vunpack.c.l.b16 %v62
    %v273 = vunpack.c.h.b16 %v62
    %v274 = vunpack.c.l.b16 %v63
    %v275 = vunpack.c.h.b16 %v63
    %v276 = vunpack.c.l.b16 %v64
    %v277 = vunpack.c.h.b16 %v64
    %v278 = vunpack.c.l.b16 %v65
    %v279 = vunpack.c.h.b16 %v65
    %v280 = vunpack.c.l.b16 %v66
    %v281 = vunpack.c.h.b16 %v66
    %v282 = vunpack.c.l.b16 %v67
    %v283 = vunpack.c.h.b16 %v67
    %v284 = vunpack.c.l.b16 %v68
    %v285 = vunpack.c.h.b16 %v68
    %v286 = vunpack.c.l.b16 %v69
    %v287 = vunpack.c.h.b16 %v69
    %v288 = vunpack.c.l.b16 %v70
    %v289 = vunpack.c.h.b16 %v70
    %v290 = vunpack.c.l.b16 %v71
    %v291 = vunpack.c.h.b16 %v71
    %v292 = vunpack.c.l.b16 %v72
    %v293 = vunpack.c.h.b16 %v72
    %v294 = vunpack.c.l.b16 %v73
    %v295 = vunpack.c.h.b16 %v73
    %v296 = vunpack.c.l.b16 %v74
    %v297 = vunpack.c.h.b16 %v74
    %v298 = vunpack.c.l.b16 %v75
    %v299 = vunpack.c.h.b16 %v75
    %v300 = vunpack.c.l.b16 %v76
    %v301 = vunpack.c.h.b16 %v76
    %v302 = vunpack.c.l.b16 %v77
    %v303 = vunpack.c.h.b16 %v77
    %v304 = vunpack.c.l.b16 %v78
    %v305 = vunpack.c.h.b16 %v78
    %v306 = vunpack.c.l.b16 %v79
    %v307 = vunpack.c.h.b16 %v79
    %v308 = vunpack.c.l.b16 %v80
    %v309 = vunpack.c.h.b16 %v80
    %v310 = vunpack.c.l.b16 %v81
    %v311 = vunpack.c.h.b16 %v81
    %v312 = vunpack.c.l.b16 %v82
    %v313 = vunpack.c.h.b16 %v82
    %v314 = vunpack.c.l.b16 %v83
    %v315 = vunpack.c.h.b16 %v83
    %v316 = vunpack.c.l.b16 %v84
    %v317 = vunpack.c.h.b16 %v84
    %v318 = vunpack.c.l.b16 %v85
    %v319 = vunpack.c.h.b16 %v85
    %v320 = vunpack.c.l.b16 %v86
    %v321 = vunpack.c.h.b16 %v86
    %v322 = vunpack.c.l.b16 %v87
    %v323 = vunpack.c.h.b16 %v87
    %v324 = vunpack.c.l.b16 %v88
    %v325 = vunpack.c.h.b16 %v88
    %v326 = vunpack.c.l.b16 %v89
    %v327 = vunpack.c.h.b16 %v89
    %v328 = vunpack.c.l.b16 %v90
    %v329 = vunpack.c.h.b16 %v90
    %v330 = vunpack.c.l.b16 %v91
    %v331 = vunpack.c.h.b16 %v91
    %v332 = vunpack.c.l.b16 %v92
    %v333 = vunpack.c.h.b16 %v92
    %v334 = vunpack.c.l.b16 %v93
    %v335 = vunpack.c.h.b16 %v93
    %v336 = vunpack.c.l.b16 %v94
    %v337 = vunpack.c.h.b16 %v94
    %v338 = vunpack.c.l.b16 %v95
    %v339 = vunpack.c.h.b16 %v95
    %v340 = vunpack.c.l.b16 %v96
    %v341 = vunpack.c.h.b16 %v96
    %v342 = vunpack.c.l.b16 %v97
    %v343 = vunpack.c.h.b16 %v97
    %v344 = vunpack.c.l.b16 %v98
    %v345 = vunpack.c.h.b16 %v98
    %v346 = vunpack.c.l.b16 %v99
    %v347 = vunpack.c.h.b16 %v99
    %v348 = vpack.c.b16 %v210, %v204
    %v349 = vpack.c.b16 %v211, %v205
    %v350 = vpack.c.b16 %v212, %v206
    %v351 = vpack.c.b16 %v213, %v207
    %v352 = vpack.c.b16 %v214, %v208
    %v353 = vpack.c.b16 %v215, %v209
    %v354 = vpack.c.b16 %v222, %v216
    %v355 = vpack.c.b16 %v223, %v217
    %v356 = vpack.c.b16 %v224, %v218
    %v357 = vpack.c.b16 %v225, %v219
    %v358 = vpack.c.b16 %v226, %v220
    %v359 = vpack.c.b16 %v227, %v221
    %v360 = vpack.c.b16 %v234, %v228
    %v361 = vpack.c.b16 %v235, %v229
    %v362 = vpack.c.b16 %v236, %v230
    %v363 = vpack.c.b16 %v237, %v231
    %v364 = vpack.c.b16 %v238, %v232
    %v365 = vpack.c.b16 %v239, %v233
    %v366 = vpack.c.b16 %v246, %v240
    %v367 = vpack.c.b16 %v247, %v241
    %v368 = vpack.c.b16 %v248, %v242
    %v369 = vpack.c.b16 %v249, %v243
    %v370 = vpack.c.b16 %v250, %v244
    %v371 = vpack.c.b16 %v251, %v245
    %v372 = vpack.c.b16 %v258, %v252
    %v373 = vpack.c.b16 %v259, %v253
    %v374 = vpack.c.b16 %v260, %v254
    %v375 = vpack.c.b16 %v261, %v255
    %v376 = vpack.c.b16 %v262, %v256
    %v377 = vpack.c.b16 %v263, %v257
    %v378 = vpack.c.b16 %v270, %v264
    %v379 = vpack.c.b16 %v271, %v265
    %v380 = vpack.c.b16 %v272, %v266
    %v381 = vpack.c.b16 %v273, %v267
    %v382 = vpack.c.b16 %v274, %v268
    %v383 = vpack.c.b16 %v275, %v269
    %v384 = vpack.c.b16 %v282, %v276
    %v385 = vpack.c.b16 %v283, %v277
    %v386 = vpack.c.b16 %v284, %v278
    %v387 = vpack.c.b16 %v285, %v279
    %v388 = vpack.c.b16 %v286, %v280
    %v389 = vpack.c.b16 %v287, %v281
    %v390 = vpack.c.b16 %v294, %v288
    %v391 = vpack.c.b16 %v295, %v289
    %v392 = vpack.c.b16 %v296, %v290
    %v393 = vpack.c.b16 %v297, %v291
    %v394 = vpack.c.b16 %v298, %v292
    %v395 = vpack.c.b16 %v299, %v293
    %v396 = vpack.c.b16 %v306, %v300
    %v397 = vpack.c.b16 %v307, %v301
    %v398 = vpack.c.b16 %v308, %v302
    %v399 = vpack.c.b16 %v309, %v303
    %v400 = vpack.c.b16 %v310, %v304
    %v401 = vpack.c.b16 %v311, %v305
    %v402 = vpack.c.b16 %v318, %v312
    %v403 = vpack.c.b16 %v319, %v313
    %v404 = vpack.c.b16 %v320, %v314
    %v405 = vpack.c.b16 %v321, %v315
    %v406 = vpack.c.b16 %v322, %v316
    %v407 = vpack.c.b16 %v323, %v317
    %v408 = vpack.c.b16 %v330, %v324
    %v409 = vpack.c.b16 %v331, %v325
    %v410 = vpack.c.b16 %v332, %v326
    %v411 = vpack.c.b16 %v333, %v327
    %v412 = vpack.c.b16 %v334, %v328
    %v413 = vpack.c.b16 %v335, %v329
    %v414 = vpack.c.b16 %v342, %v336
    %v415 = vpack.c.b16 %v343, %v337
    %v416 = vpack.c.b16 %v344, %v338
    %v417 = vpack.c.b16 %v345, %v339
    %v418 = vpack.c.b16 %v346, %v340
    %v419 = vpack.c.b16 %v347, %v341
    %vm492 = vcmask 523264
    %v494 = vsel %vm492, %v27, 0
    %496 = vmatprep.subr.bf16.mxu0 %v349
    %497 = vmatpush1.bf16.msra.mxu0 %v348
    %498 = vmatprep.subr.bf16.mxu0 %v355
    %499 = vmatpush1.bf16.msra.mxu0 %v354
    %500 = vmatprep.subr.bf16.mxu0 %v361
    %501 = vmatpush1.bf16.msra.mxu0 %v360
    %502 = vmatprep.subr.bf16.mxu0 %v367
    %503 = vmatpush1.bf16.msra.mxu0 %v366
    %504 = vmatprep.subr.bf16.mxu0 %v373
    %505 = vmatpush1.bf16.msra.mxu0 %v372
    %506 = vmatprep.subr.bf16.mxu0 %v379
    %507 = vmatpush1.bf16.msra.mxu0 %v378
    %508 = vmatprep.subr.bf16.mxu0 %v385
    %509 = vmatpush1.bf16.msra.mxu0 %v384
    %510 = vmatprep.subr.bf16.mxu0 %v391
    %511 = vmatpush1.bf16.msra.mxu0 %v390
    %512 = vmatprep.subr.bf16.mxu0 %v397
    %513 = vmatpush1.bf16.msra.mxu0 %v396
    %514 = vmatprep.subr.bf16.mxu0 %v403
    %515 = vmatpush1.bf16.msra.mxu0 %v402
    %516 = vmatprep.subr.bf16.mxu0 %v409
    %517 = vmatpush1.bf16.msra.mxu0 %v408
    %518 = vmatprep.subr.bf16.mxu0 %v415
    %519 = vmatpush1.bf16.msra.mxu0 %v414
    %520 = vmatprep.subr.bf16.mxu0 0
    %521 = vmatpush1.bf16.msra.mxu0 0
    %522 = vmatprep.subr.bf16.mxu0 0
    %523 = vmatpush1.bf16.msra.mxu0 0
    %524 = vmatprep.subr.bf16.mxu0 0
    %525 = vmatpush1.bf16.msra.mxu0 0
    %526 = vmatprep.subr.bf16.mxu0 0
    %527 = vmatpush1.bf16.msra.mxu0 0
    %528 = vmatprep.mubr.bf16.mxu0 %v494
    %529 = vmatmul.mubr.bf16.gmra.mrb[0].mxu0 %v26
    %v530 = vpop.f32.mrb[0].mxu0
    %v531 = vadd.f32 %v105, %v530
    %v532 = vpop.f32.mrb[0].mxu0
    %v533 = vadd.f32 %v109, %v532
    %v534 = vpop.f32.mrb[0].mxu0
    %v535 = vadd.f32 %v105, %v534
    %v536 = vpop.f32.mrb[0].mxu0
    %v537 = vadd.f32 %v109, %v536
    %538 = vdwg.mxu0
    %539 = vmatprep.subr.bf16.mxu0 %v351
    %540 = vmatpush1.bf16.msra.mxu0 %v350
    %541 = vmatprep.subr.bf16.mxu0 %v357
    %542 = vmatpush1.bf16.msra.mxu0 %v356
    %543 = vmatprep.subr.bf16.mxu0 %v363
    %544 = vmatpush1.bf16.msra.mxu0 %v362
    %545 = vmatprep.subr.bf16.mxu0 %v369
    %546 = vmatpush1.bf16.msra.mxu0 %v368
    %547 = vmatprep.subr.bf16.mxu0 %v375
    %548 = vmatpush1.bf16.msra.mxu0 %v374
    %549 = vmatprep.subr.bf16.mxu0 %v381
    %550 = vmatpush1.bf16.msra.mxu0 %v380
    %551 = vmatprep.subr.bf16.mxu0 %v387
    %552 = vmatpush1.bf16.msra.mxu0 %v386
    %553 = vmatprep.subr.bf16.mxu0 %v393
    %554 = vmatpush1.bf16.msra.mxu0 %v392
    %555 = vmatprep.subr.bf16.mxu0 %v399
    %556 = vmatpush1.bf16.msra.mxu0 %v398
    %557 = vmatprep.subr.bf16.mxu0 %v405
    %558 = vmatpush1.bf16.msra.mxu0 %v404
    %559 = vmatprep.subr.bf16.mxu0 %v411
    %560 = vmatpush1.bf16.msra.mxu0 %v410
    %561 = vmatprep.subr.bf16.mxu0 %v417
    %562 = vmatpush1.bf16.msra.mxu0 %v416
    %563 = vmatprep.subr.bf16.mxu0 0
    %564 = vmatpush1.bf16.msra.mxu0 0
    %565 = vmatprep.subr.bf16.mxu0 0
    %566 = vmatpush1.bf16.msra.mxu0 0
    %567 = vmatprep.subr.bf16.mxu0 0
    %568 = vmatpush1.bf16.msra.mxu0 0
    %569 = vmatprep.subr.bf16.mxu0 0
    %570 = vmatpush1.bf16.msra.mxu0 0
    %571 = vmatprep.mubr.bf16.mxu0 %v494
    %572 = vmatmul.mubr.bf16.gmra.mrb[0].mxu0 %v26
    %v573 = vpop.f32.mrb[0].mxu0
    %v574 = vadd.f32 %v113, %v573
    %v575 = vpop.f32.mrb[0].mxu0
    %v576 = vadd.f32 %v117, %v575
    %v577 = vpop.f32.mrb[0].mxu0
    %v578 = vadd.f32 %v113, %v577
    %v579 = vpop.f32.mrb[0].mxu0
    %v580 = vadd.f32 %v117, %v579
    %581 = vdwg.mxu0
    %582 = vmatprep.subr.bf16.mxu0 %v353
    %583 = vmatpush1.bf16.msra.mxu0 %v352
    %584 = vmatprep.subr.bf16.mxu0 %v359
    %585 = vmatpush1.bf16.msra.mxu0 %v358
    %586 = vmatprep.subr.bf16.mxu0 %v365
    %587 = vmatpush1.bf16.msra.mxu0 %v364
    %588 = vmatprep.subr.bf16.mxu0 %v371
    %589 = vmatpush1.bf16.msra.mxu0 %v370
    %590 = vmatprep.subr.bf16.mxu0 %v377
    %591 = vmatpush1.bf16.msra.mxu0 %v376
    %592 = vmatprep.subr.bf16.mxu0 %v383
    %593 = vmatpush1.bf16.msra.mxu0 %v382
    %594 = vmatprep.subr.bf16.mxu0 %v389
    %595 = vmatpush1.bf16.msra.mxu0 %v388
    %596 = vmatprep.subr.bf16.mxu0 %v395
    %597 = vmatpush1.bf16.msra.mxu0 %v394
    %598 = vmatprep.subr.bf16.mxu0 %v401
    %599 = vmatpush1.bf16.msra.mxu0 %v400
    %600 = vmatprep.subr.bf16.mxu0 %v407
    %601 = vmatpush1.bf16.msra.mxu0 %v406
    %602 = vmatprep.subr.bf16.mxu0 %v413
    %603 = vmatpush1.bf16.msra.mxu0 %v412
    %604 = vmatprep.subr.bf16.mxu0 %v419
    %605 = vmatpush1.bf16.msra.mxu0 %v418
    %606 = vmatprep.subr.bf16.mxu0 0
    %607 = vmatpush1.bf16.msra.mxu0 0
    %608 = vmatprep.subr.bf16.mxu0 0
    %609 = vmatpush1.bf16.msra.mxu0 0
    %610 = vmatprep.subr.bf16.mxu0 0
    %611 = vmatpush1.bf16.msra.mxu0 0
    %612 = vmatprep.subr.bf16.mxu0 0
    %613 = vmatpush1.bf16.msra.mxu0 0
    %614 = vmatprep.mubr.bf16.mxu0 %v494
    %615 = vmatmul.mubr.bf16.gmra.mrb[0].mxu0 %v26
    %v616 = vpop.f32.mrb[0].mxu0
    %v617 = vadd.f32 %v121, %v616
    %v618 = vpop.f32.mrb[0].mxu0
    %v619 = vadd.f32 %v125, %v618
    %v620 = vpop.f32.mrb[0].mxu0
    %v621 = vadd.f32 %v121, %v620
    %v622 = vpop.f32.mrb[0].mxu0
    %v623 = vadd.f32 %v125, %v622
    %624 = vdwg.mxu0
    %v625 = vmax.f32 %v531, 0.0
    %v626 = vmax.f32 %v533, 0.0
    %v627 = vmax.f32 %v574, 0.0
    %v628 = vmax.f32 %v576, 0.0
    %v629 = vmax.f32 %v617, 0.0
    %v630 = vmax.f32 %v619, 0.0
    %v631 = vmax.f32 %v535, 0.0
    %v632 = vmax.f32 %v537, 0.0
    %v633 = vmax.f32 %v578, 0.0
    %v634 = vmax.f32 %v580, 0.0
    %v635 = vmax.f32 %v621, 0.0
    %v636 = vmax.f32 %v623, 0.0
    %v637 = vpack.c.bf16 %v631, %v625
    %v638 = vpack.c.bf16 %v632, %v626
    %v639 = vpack.c.bf16 %v633, %v627
    %v640 = vpack.c.bf16 %v634, %v628
    %v641 = vpack.c.bf16 %v635, %v629
    %v642 = vpack.c.bf16 %v636, %v630
    %v643 = vld [vmem:[%s3] sm:$0xff]
    %v644 = vld [vmem:[%s3 + $0x8] sm:$0xff]
    %v645 = vld [vmem:[%s3 + $0x10] sm:$0xff]
    %v646 = vld [vmem:[%s3 + $0x18] sm:$0xff]
    %v647 = vld [vmem:[%s3 + $0x20] sm:$0xff]
    %v648 = vld [vmem:[%s3 + $0x28] sm:$0xff]
    %v649 = vld [vmem:[%s3 + $0x30] sm:$0xff]
    %v650 = vld [vmem:[%s3 + $0x38] sm:$0xff]
    %v651 = vld [vmem:[%s3 + $0x40] sm:$0xff]
    %v652 = vld [vmem:[%s3 + $0x48] sm:$0xff]
    %v653 = vld [vmem:[%s3 + $0x50] sm:$0xff]
    %v654 = vld [vmem:[%s3 + $0x58] sm:$0xff]
    %v655 = vld [vmem:[%s3 + $0x60] sm:$0xff]
    %v656 = vld [vmem:[%s3 + $0x68] sm:$0xff]
    %v657 = vld [vmem:[%s3 + $0x70] sm:$0xff]
    %v658 = vld [vmem:[%s3 + $0x78] sm:$0xff]
    %v659 = vld [vmem:[%s3 + $0x80] sm:$0xff]
    %v660 = vld [vmem:[%s3 + $0x88] sm:$0xff]
    %v661 = vld [vmem:[%s3 + $0x90] sm:$0xff]
    %v662 = vld [vmem:[%s3 + $0x98] sm:$0xff]
    %v663 = vld [vmem:[%s3 + $0xa0] sm:$0xff]
    %v664 = vld [vmem:[%s3 + $0xa8] sm:$0xff]
    %v665 = vld [vmem:[%s3 + $0xb0] sm:$0xff]
    %v666 = vld [vmem:[%s3 + $0xb8] sm:$0xff]
    %v667 = vld [vmem:[%s3 + $0xc0] sm:$0xff]
    %v668 = vld [vmem:[%s3 + $0xc8] sm:$0xff]
    %v669 = vld [vmem:[%s3 + $0xd0] sm:$0xff]
    %v670 = vld [vmem:[%s3 + $0xd8] sm:$0xff]
    %v671 = vld [vmem:[%s3 + $0xe0] sm:$0xff]
    %v672 = vld [vmem:[%s3 + $0xe8] sm:$0xff]
    %v673 = vld [vmem:[%s3 + $0xf0] sm:$0xff]
    %v674 = vld [vmem:[%s3 + $0xf8] sm:$0xff]
    %v675 = vld [vmem:[%s3 + $0x100] sm:$0xff]
    %v676 = vld [vmem:[%s3 + $0x108] sm:$0xff]
    %v677 = vld [vmem:[%s3 + $0x110] sm:$0xff]
    %v678 = vld [vmem:[%s3 + $0x118] sm:$0xff]
    %v679 = vld [vmem:[%s3 + $0x120] sm:$0xff]
    %v680 = vld [vmem:[%s3 + $0x128] sm:$0xff]
    %v681 = vld [vmem:[%s3 + $0x130] sm:$0xff]
    %v682 = vld [vmem:[%s3 + $0x138] sm:$0xff]
    %v683 = vld [vmem:[%s3 + $0x140] sm:$0xff]
    %v684 = vld [vmem:[%s3 + $0x148] sm:$0xff]
    %v685 = vld [vmem:[%s3 + $0x150] sm:$0xff]
    %v686 = vld [vmem:[%s3 + $0x158] sm:$0xff]
    %v687 = vld [vmem:[%s3 + $0x160] sm:$0xff]
    %v688 = vld [vmem:[%s3 + $0x168] sm:$0xff]
    %v689 = vld [vmem:[%s3 + $0x170] sm:$0xff]
    %v690 = vld [vmem:[%s3 + $0x178] sm:$0xff]
    %v691 = vld [vmem:[%s3 + $0x180] sm:$0xff]
    %v692 = vld [vmem:[%s3 + $0x188] sm:$0xff]
    %v693 = vld [vmem:[%s3 + $0x190] sm:$0xff]
    %v694 = vld [vmem:[%s3 + $0x198] sm:$0xff]
    %v695 = vld [vmem:[%s3 + $0x1a0] sm:$0xff]
    %v696 = vld [vmem:[%s3 + $0x1a8] sm:$0xff]
    %v697 = vld [vmem:[%s3 + $0x1b0] sm:$0xff]
    %v698 = vld [vmem:[%s3 + $0x1b8] sm:$0xff]
    %v699 = vld [vmem:[%s3 + $0x1c0] sm:$0xff]
    %v700 = vld [vmem:[%s3 + $0x1c8] sm:$0xff]
    %v701 = vld [vmem:[%s3 + $0x1d0] sm:$0xff]
    %v702 = vld [vmem:[%s3 + $0x1d8] sm:$0xff]
    %v703 = vld [vmem:[%s3 + $0x1e0] sm:$0xff]
    %v704 = vld [vmem:[%s3 + $0x1e8] sm:$0xff]
    %v705 = vld [vmem:[%s3 + $0x1f0] sm:$0xff]
    %v706 = vld [vmem:[%s3 + $0x1f8] sm:$0xff]
    %v707 = vld [vmem:[%s3 + $0x200] sm:$0xff]
    %v708 = vld [vmem:[%s3 + $0x208] sm:$0xff]
    %v709 = vld [vmem:[%s3 + $0x210] sm:$0xff]
    %v710 = vld [vmem:[%s3 + $0x218] sm:$0xff]
    %v711 = vld [vmem:[%s3 + $0x220] sm:$0xff]
    %v712 = vld [vmem:[%s3 + $0x228] sm:$0xff]
    %v713 = vld [vmem:[%s3 + $0x230] sm:$0xff]
    %v714 = vld [vmem:[%s3 + $0x238] sm:$0xff]
    %v715 = vld [vmem:[%s3 + $0x240] sm:$0xff]
    %v716 = vld [vmem:[%s3 + $0x248] sm:$0xff]
    %v717 = vld [vmem:[%s3 + $0x250] sm:$0xff]
    %v718 = vld [vmem:[%s3 + $0x258] sm:$0xff]
    %v719 = vld [vmem:[%s3 + $0x260] sm:$0xff]
    %v720 = vld [vmem:[%s3 + $0x268] sm:$0xff]
    %v721 = vld [vmem:[%s3 + $0x270] sm:$0xff]
    %v722 = vld [vmem:[%s3 + $0x278] sm:$0xff]
    %v723 = vld [vmem:[%s3 + $0x280] sm:$0xff]
    %v724 = vld [vmem:[%s3 + $0x288] sm:$0xff]
    %v725 = vld [vmem:[%s3 + $0x290] sm:$0xff]
    %v726 = vld [vmem:[%s3 + $0x298] sm:$0xff]
    %v727 = vld [vmem:[%s3 + $0x2a0] sm:$0xff]
    %v728 = vld [vmem:[%s3 + $0x2a8] sm:$0xff]
    %v729 = vld [vmem:[%s3 + $0x2b0] sm:$0xff]
    %v730 = vld [vmem:[%s3 + $0x2b8] sm:$0xff]
    %v731 = vld [vmem:[%s3 + $0x2c0] sm:$0xff]
    %v732 = vld [vmem:[%s3 + $0x2c8] sm:$0xff]
    %v733 = vld [vmem:[%s3 + $0x2d0] sm:$0xff]
    %v734 = vld [vmem:[%s3 + $0x2d8] sm:$0xff]
    %v735 = vld [vmem:[%s3 + $0x2e0] sm:$0xff]
    %v736 = vld [vmem:[%s3 + $0x2e8] sm:$0xff]
    %v737 = vld [vmem:[%s3 + $0x2f0] sm:$0xff]
    %v738 = vld [vmem:[%s3 + $0x2f8] sm:$0xff]
    %v739 = vld [vmem:[%s4] sm:$0x3]
    %v741 = vlaneseq
    %v742 = vshrl.u32 %v741, 7
    %v743 = vsub.s32 0, %v742
    %v744 = vrot.slane %v739, %v743
    %v745 = vlaneseq
    %v746 = vshrl.u32 %v745, 7
    %v747 = vsub.s32 1, %v746
    %v748 = vrot.slane %v739, %v747
    %v847 = vunpack.c.l.b16 %v643
    %v848 = vunpack.c.h.b16 %v643
    %v849 = vunpack.c.l.b16 %v644
    %v850 = vunpack.c.h.b16 %v644
    %v851 = vunpack.c.l.b16 %v645
    %v852 = vunpack.c.h.b16 %v645
    %v853 = vunpack.c.l.b16 %v646
    %v854 = vunpack.c.h.b16 %v646
    %v855 = vunpack.c.l.b16 %v647
    %v856 = vunpack.c.h.b16 %v647
    %v857 = vunpack.c.l.b16 %v648
    %v858 = vunpack.c.h.b16 %v648
    %v859 = vunpack.c.l.b16 %v649
    %v860 = vunpack.c.h.b16 %v649
    %v861 = vunpack.c.l.b16 %v650
    %v862 = vunpack.c.h.b16 %v650
    %v863 = vunpack.c.l.b16 %v651
    %v864 = vunpack.c.h.b16 %v651
    %v865 = vunpack.c.l.b16 %v652
    %v866 = vunpack.c.h.b16 %v652
    %v867 = vunpack.c.l.b16 %v653
    %v868 = vunpack.c.h.b16 %v653
    %v869 = vunpack.c.l.b16 %v654
    %v870 = vunpack.c.h.b16 %v654
    %v871 = vunpack.c.l.b16 %v655
    %v872 = vunpack.c.h.b16 %v655
    %v873 = vunpack.c.l.b16 %v656
    %v874 = vunpack.c.h.b16 %v656
    %v875 = vunpack.c.l.b16 %v657
    %v876 = vunpack.c.h.b16 %v657
    %v877 = vunpack.c.l.b16 %v658
    %v878 = vunpack.c.h.b16 %v658
    %v879 = vunpack.c.l.b16 %v659
    %v880 = vunpack.c.h.b16 %v659
    %v881 = vunpack.c.l.b16 %v660
    %v882 = vunpack.c.h.b16 %v660
    %v883 = vunpack.c.l.b16 %v661
    %v884 = vunpack.c.h.b16 %v661
    %v885 = vunpack.c.l.b16 %v662
    %v886 = vunpack.c.h.b16 %v662
    %v887 = vunpack.c.l.b16 %v663
    %v888 = vunpack.c.h.b16 %v663
    %v889 = vunpack.c.l.b16 %v664
    %v890 = vunpack.c.h.b16 %v664
    %v891 = vunpack.c.l.b16 %v665
    %v892 = vunpack.c.h.b16 %v665
    %v893 = vunpack.c.l.b16 %v666
    %v894 = vunpack.c.h.b16 %v666
    %v895 = vunpack.c.l.b16 %v667
    %v896 = vunpack.c.h.b16 %v667
    %v897 = vunpack.c.l.b16 %v668
    %v898 = vunpack.c.h.b16 %v668
    %v899 = vunpack.c.l.b16 %v669
    %v900 = vunpack.c.h.b16 %v669
    %v901 = vunpack.c.l.b16 %v670
    %v902 = vunpack.c.h.b16 %v670
    %v903 = vunpack.c.l.b16 %v671
    %v904 = vunpack.c.h.b16 %v671
    %v905 = vunpack.c.l.b16 %v672
    %v906 = vunpack.c.h.b16 %v672
    %v907 = vunpack.c.l.b16 %v673
    %v908 = vunpack.c.h.b16 %v673
    %v909 = vunpack.c.l.b16 %v674
    %v910 = vunpack.c.h.b16 %v674
    %v911 = vunpack.c.l.b16 %v675
    %v912 = vunpack.c.h.b16 %v675
    %v913 = vunpack.c.l.b16 %v676
    %v914 = vunpack.c.h.b16 %v676
    %v915 = vunpack.c.l.b16 %v677
    %v916 = vunpack.c.h.b16 %v677
    %v917 = vunpack.c.l.b16 %v678
    %v918 = vunpack.c.h.b16 %v678
    %v919 = vunpack.c.l.b16 %v679
    %v920 = vunpack.c.h.b16 %v679
    %v921 = vunpack.c.l.b16 %v680
    %v922 = vunpack.c.h.b16 %v680
    %v923 = vunpack.c.l.b16 %v681
    %v924 = vunpack.c.h.b16 %v681
    %v925 = vunpack.c.l.b16 %v682
    %v926 = vunpack.c.h.b16 %v682
    %v927 = vunpack.c.l.b16 %v683
    %v928 = vunpack.c.h.b16 %v683
    %v929 = vunpack.c.l.b16 %v684
    %v930 = vunpack.c.h.b16 %v684
    %v931 = vunpack.c.l.b16 %v685
    %v932 = vunpack.c.h.b16 %v685
    %v933 = vunpack.c.l.b16 %v686
    %v934 = vunpack.c.h.b16 %v686
    %v935 = vunpack.c.l.b16 %v687
    %v936 = vunpack.c.h.b16 %v687
    %v937 = vunpack.c.l.b16 %v688
    %v938 = vunpack.c.h.b16 %v688
    %v939 = vunpack.c.l.b16 %v689
    %v940 = vunpack.c.h.b16 %v689
    %v941 = vunpack.c.l.b16 %v690
    %v942 = vunpack.c.h.b16 %v690
    %v943 = vunpack.c.l.b16 %v691
    %v944 = vunpack.c.h.b16 %v691
    %v945 = vunpack.c.l.b16 %v692
    %v946 = vunpack.c.h.b16 %v692
    %v947 = vunpack.c.l.b16 %v693
    %v948 = vunpack.c.h.b16 %v693
    %v949 = vunpack.c.l.b16 %v694
    %v950 = vunpack.c.h.b16 %v694
    %v951 = vunpack.c.l.b16 %v695
    %v952 = vunpack.c.h.b16 %v695
    %v953 = vunpack.c.l.b16 %v696
    %v954 = vunpack.c.h.b16 %v696
    %v955 = vunpack.c.l.b16 %v697
    %v956 = vunpack.c.h.b16 %v697
    %v957 = vunpack.c.l.b16 %v698
    %v958 = vunpack.c.h.b16 %v698
    %v959 = vunpack.c.l.b16 %v699
    %v960 = vunpack.c.h.b16 %v699
    %v961 = vunpack.c.l.b16 %v700
    %v962 = vunpack.c.h.b16 %v700
    %v963 = vunpack.c.l.b16 %v701
    %v964 = vunpack.c.h.b16 %v701
    %v965 = vunpack.c.l.b16 %v702
    %v966 = vunpack.c.h.b16 %v702
    %v967 = vunpack.c.l.b16 %v703
    %v968 = vunpack.c.h.b16 %v703
    %v969 = vunpack.c.l.b16 %v704
    %v970 = vunpack.c.h.b16 %v704
    %v971 = vunpack.c.l.b16 %v705
    %v972 = vunpack.c.h.b16 %v705
    %v973 = vunpack.c.l.b16 %v706
    %v974 = vunpack.c.h.b16 %v706
    %v975 = vunpack.c.l.b16 %v707
    %v976 = vunpack.c.h.b16 %v707
    %v977 = vunpack.c.l.b16 %v708
    %v978 = vunpack.c.h.b16 %v708
    %v979 = vunpack.c.l.b16 %v709
    %v980 = vunpack.c.h.b16 %v709
    %v981 = vunpack.c.l.b16 %v710
    %v982 = vunpack.c.h.b16 %v710
    %v983 = vunpack.c.l.b16 %v711
    %v984 = vunpack.c.h.b16 %v711
    %v985 = vunpack.c.l.b16 %v712
    %v986 = vunpack.c.h.b16 %v712
    %v987 = vunpack.c.l.b16 %v713
    %v988 = vunpack.c.h.b16 %v713
    %v989 = vunpack.c.l.b16 %v714
    %v990 = vunpack.c.h.b16 %v714
    %v991 = vunpack.c.l.b16 %v715
    %v992 = vunpack.c.h.b16 %v715
    %v993 = vunpack.c.l.b16 %v716
    %v994 = vunpack.c.h.b16 %v716
    %v995 = vunpack.c.l.b16 %v717
    %v996 = vunpack.c.h.b16 %v717
    %v997 = vunpack.c.l.b16 %v718
    %v998 = vunpack.c.h.b16 %v718
    %v999 = vunpack.c.l.b16 %v719
    %v1000 = vunpack.c.h.b16 %v719
    %v1001 = vunpack.c.l.b16 %v720
    %v1002 = vunpack.c.h.b16 %v720
    %v1003 = vunpack.c.l.b16 %v721
    %v1004 = vunpack.c.h.b16 %v721
    %v1005 = vunpack.c.l.b16 %v722
    %v1006 = vunpack.c.h.b16 %v722
    %v1007 = vunpack.c.l.b16 %v723
    %v1008 = vunpack.c.h.b16 %v723
    %v1009 = vunpack.c.l.b16 %v724
    %v1010 = vunpack.c.h.b16 %v724
    %v1011 = vunpack.c.l.b16 %v725
    %v1012 = vunpack.c.h.b16 %v725
    %v1013 = vunpack.c.l.b16 %v726
    %v1014 = vunpack.c.h.b16 %v726
    %v1015 = vunpack.c.l.b16 %v727
    %v1016 = vunpack.c.h.b16 %v727
    %v1017 = vunpack.c.l.b16 %v728
    %v1018 = vunpack.c.h.b16 %v728
    %v1019 = vunpack.c.l.b16 %v729
    %v1020 = vunpack.c.h.b16 %v729
    %v1021 = vunpack.c.l.b16 %v730
    %v1022 = vunpack.c.h.b16 %v730
    %v1023 = vunpack.c.l.b16 %v731
    %v1024 = vunpack.c.h.b16 %v731
    %v1025 = vunpack.c.l.b16 %v732
    %v1026 = vunpack.c.h.b16 %v732
    %v1027 = vunpack.c.l.b16 %v733
    %v1028 = vunpack.c.h.b16 %v733
    %v1029 = vunpack.c.l.b16 %v734
    %v1030 = vunpack.c.h.b16 %v734
    %v1031 = vunpack.c.l.b16 %v735
    %v1032 = vunpack.c.h.b16 %v735
    %v1033 = vunpack.c.l.b16 %v736
    %v1034 = vunpack.c.h.b16 %v736
    %v1035 = vunpack.c.l.b16 %v737
    %v1036 = vunpack.c.h.b16 %v737
    %v1037 = vunpack.c.l.b16 %v738
    %v1038 = vunpack.c.h.b16 %v738
    %v1039 = vpack.c.b16 %v849, %v847
    %v1040 = vpack.c.b16 %v850, %v848
    %v1041 = vpack.c.b16 %v853, %v851
    %v1042 = vpack.c.b16 %v854, %v852
    %v1043 = vpack.c.b16 %v857, %v855
    %v1044 = vpack.c.b16 %v858, %v856
    %v1045 = vpack.c.b16 %v861, %v859
    %v1046 = vpack.c.b16 %v862, %v860
    %v1047 = vpack.c.b16 %v865, %v863
    %v1048 = vpack.c.b16 %v866, %v864
    %v1049 = vpack.c.b16 %v869, %v867
    %v1050 = vpack.c.b16 %v870, %v868
    %v1051 = vpack.c.b16 %v873, %v871
    %v1052 = vpack.c.b16 %v874, %v872
    %v1053 = vpack.c.b16 %v877, %v875
    %v1054 = vpack.c.b16 %v878, %v876
    %v1055 = vpack.c.b16 %v881, %v879
    %v1056 = vpack.c.b16 %v882, %v880
    %v1057 = vpack.c.b16 %v885, %v883
    %v1058 = vpack.c.b16 %v886, %v884
    %v1059 = vpack.c.b16 %v889, %v887
    %v1060 = vpack.c.b16 %v890, %v888
    %v1061 = vpack.c.b16 %v893, %v891
    %v1062 = vpack.c.b16 %v894, %v892
    %v1063 = vpack.c.b16 %v897, %v895
    %v1064 = vpack.c.b16 %v898, %v896
    %v1065 = vpack.c.b16 %v901, %v899
    %v1066 = vpack.c.b16 %v902, %v900
    %v1067 = vpack.c.b16 %v905, %v903
    %v1068 = vpack.c.b16 %v906, %v904
    %v1069 = vpack.c.b16 %v909, %v907
    %v1070 = vpack.c.b16 %v910, %v908
    %v1071 = vpack.c.b16 %v913, %v911
    %v1072 = vpack.c.b16 %v914, %v912
    %v1073 = vpack.c.b16 %v917, %v915
    %v1074 = vpack.c.b16 %v918, %v916
    %v1075 = vpack.c.b16 %v921, %v919
    %v1076 = vpack.c.b16 %v922, %v920
    %v1077 = vpack.c.b16 %v925, %v923
    %v1078 = vpack.c.b16 %v926, %v924
    %v1079 = vpack.c.b16 %v929, %v927
    %v1080 = vpack.c.b16 %v930, %v928
    %v1081 = vpack.c.b16 %v933, %v931
    %v1082 = vpack.c.b16 %v934, %v932
    %v1083 = vpack.c.b16 %v937, %v935
    %v1084 = vpack.c.b16 %v938, %v936
    %v1085 = vpack.c.b16 %v941, %v939
    %v1086 = vpack.c.b16 %v942, %v940
    %v1087 = vpack.c.b16 %v945, %v943
    %v1088 = vpack.c.b16 %v946, %v944
    %v1089 = vpack.c.b16 %v949, %v947
    %v1090 = vpack.c.b16 %v950, %v948
    %v1091 = vpack.c.b16 %v953, %v951
    %v1092 = vpack.c.b16 %v954, %v952
    %v1093 = vpack.c.b16 %v957, %v955
    %v1094 = vpack.c.b16 %v958, %v956
    %v1095 = vpack.c.b16 %v961, %v959
    %v1096 = vpack.c.b16 %v962, %v960
    %v1097 = vpack.c.b16 %v965, %v963
    %v1098 = vpack.c.b16 %v966, %v964
    %v1099 = vpack.c.b16 %v969, %v967
    %v1100 = vpack.c.b16 %v970, %v968
    %v1101 = vpack.c.b16 %v973, %v971
    %v1102 = vpack.c.b16 %v974, %v972
    %v1103 = vpack.c.b16 %v977, %v975
    %v1104 = vpack.c.b16 %v978, %v976
    %v1105 = vpack.c.b16 %v981, %v979
    %v1106 = vpack.c.b16 %v982, %v980
    %v1107 = vpack.c.b16 %v985, %v983
    %v1108 = vpack.c.b16 %v986, %v984
    %v1109 = vpack.c.b16 %v989, %v987
    %v1110 = vpack.c.b16 %v990, %v988
    %v1111 = vpack.c.b16 %v993, %v991
    %v1112 = vpack.c.b16 %v994, %v992
    %v1113 = vpack.c.b16 %v997, %v995
    %v1114 = vpack.c.b16 %v998, %v996
    %v1115 = vpack.c.b16 %v1001, %v999
    %v1116 = vpack.c.b16 %v1002, %v1000
    %v1117 = vpack.c.b16 %v1005, %v1003
    %v1118 = vpack.c.b16 %v1006, %v1004
    %v1119 = vpack.c.b16 %v1009, %v1007
    %v1120 = vpack.c.b16 %v1010, %v1008
    %v1121 = vpack.c.b16 %v1013, %v1011
    %v1122 = vpack.c.b16 %v1014, %v1012
    %v1123 = vpack.c.b16 %v1017, %v1015
    %v1124 = vpack.c.b16 %v1018, %v1016
    %v1125 = vpack.c.b16 %v1021, %v1019
    %v1126 = vpack.c.b16 %v1022, %v1020
    %v1127 = vpack.c.b16 %v1025, %v1023
    %v1128 = vpack.c.b16 %v1026, %v1024
    %v1129 = vpack.c.b16 %v1029, %v1027
    %v1130 = vpack.c.b16 %v1030, %v1028
    %v1131 = vpack.c.b16 %v1033, %v1031
    %v1132 = vpack.c.b16 %v1034, %v1032
    %v1133 = vpack.c.b16 %v1037, %v1035
    %v1134 = vpack.c.b16 %v1038, %v1036
    %1231 = vmatprep.subr.bf16.mxu0 %v1040
    %1232 = vmatpush1.bf16.msra.mxu0 %v1039
    %1233 = vmatprep.subr.bf16.mxu0 %v1042
    %1234 = vmatpush1.bf16.msra.mxu0 %v1041
    %1235 = vmatprep.subr.bf16.mxu0 %v1044
    %1236 = vmatpush1.bf16.msra.mxu0 %v1043
    %1237 = vmatprep.subr.bf16.mxu0 %v1046
    %1238 = vmatpush1.bf16.msra.mxu0 %v1045
    %1239 = vmatprep.subr.bf16.mxu0 %v1048
    %1240 = vmatpush1.bf16.msra.mxu0 %v1047
    %1241 = vmatprep.subr.bf16.mxu0 %v1050
    %1242 = vmatpush1.bf16.msra.mxu0 %v1049
    %1243 = vmatprep.subr.bf16.mxu0 %v1052
    %1244 = vmatpush1.bf16.msra.mxu0 %v1051
    %1245 = vmatprep.subr.bf16.mxu0 %v1054
    %1246 = vmatpush1.bf16.msra.mxu0 %v1053
    %1247 = vmatprep.subr.bf16.mxu0 %v1056
    %1248 = vmatpush1.bf16.msra.mxu0 %v1055
    %1249 = vmatprep.subr.bf16.mxu0 %v1058
    %1250 = vmatpush1.bf16.msra.mxu0 %v1057
    %1251 = vmatprep.subr.bf16.mxu0 %v1060
    %1252 = vmatpush1.bf16.msra.mxu0 %v1059
    %1253 = vmatprep.subr.bf16.mxu0 %v1062
    %1254 = vmatpush1.bf16.msra.mxu0 %v1061
    %1255 = vmatprep.subr.bf16.mxu0 %v1064
    %1256 = vmatpush1.bf16.msra.mxu0 %v1063
    %1257 = vmatprep.subr.bf16.mxu0 %v1066
    %1258 = vmatpush1.bf16.msra.mxu0 %v1065
    %1259 = vmatprep.subr.bf16.mxu0 %v1068
    %1260 = vmatpush1.bf16.msra.mxu0 %v1067
    %1261 = vmatprep.subr.bf16.mxu0 %v1070
    %1262 = vmatpush1.bf16.msra.mxu0 %v1069
    %1263 = vmatprep.mubr.bf16.mxu0 %v638
    %1264 = vmatmul.mubr.bf16.gmra.mrb[0].mxu0 %v637
    %v1265 = vpop.f32.mrb[0].mxu0
    %v1266 = vadd.f32 %v744, %v1265
    %v1267 = vpop.f32.mrb[0].mxu0
    %v1268 = vadd.f32 %v748, %v1267
    %v1269 = vpop.f32.mrb[0].mxu0
    %v1270 = vadd.f32 %v744, %v1269
    %v1271 = vpop.f32.mrb[0].mxu0
    %v1272 = vadd.f32 %v748, %v1271
    %1273 = vdwg.mxu0
    %1274 = vmatprep.subr.bf16.mxu0 %v1072
    %1275 = vmatpush1.bf16.msra.mxu0 %v1071
    %1276 = vmatprep.subr.bf16.mxu0 %v1074
    %1277 = vmatpush1.bf16.msra.mxu0 %v1073
    %1278 = vmatprep.subr.bf16.mxu0 %v1076
    %1279 = vmatpush1.bf16.msra.mxu0 %v1075
    %1280 = vmatprep.subr.bf16.mxu0 %v1078
    %1281 = vmatpush1.bf16.msra.mxu0 %v1077
    %1282 = vmatprep.subr.bf16.mxu0 %v1080
    %1283 = vmatpush1.bf16.msra.mxu0 %v1079
    %1284 = vmatprep.subr.bf16.mxu0 %v1082
    %1285 = vmatpush1.bf16.msra.mxu0 %v1081
    %1286 = vmatprep.subr.bf16.mxu0 %v1084
    %1287 = vmatpush1.bf16.msra.mxu0 %v1083
    %1288 = vmatprep.subr.bf16.mxu0 %v1086
    %1289 = vmatpush1.bf16.msra.mxu0 %v1085
    %1290 = vmatprep.subr.bf16.mxu0 %v1088
    %1291 = vmatpush1.bf16.msra.mxu0 %v1087
    %1292 = vmatprep.subr.bf16.mxu0 %v1090
    %1293 = vmatpush1.bf16.msra.mxu0 %v1089
    %1294 = vmatprep.subr.bf16.mxu0 %v1092
    %1295 = vmatpush1.bf16.msra.mxu0 %v1091
    %1296 = vmatprep.subr.bf16.mxu0 %v1094
    %1297 = vmatpush1.bf16.msra.mxu0 %v1093
    %1298 = vmatprep.subr.bf16.mxu0 %v1096
    %1299 = vmatpush1.bf16.msra.mxu0 %v1095
    %1300 = vmatprep.subr.bf16.mxu0 %v1098
    %1301 = vmatpush1.bf16.msra.mxu0 %v1097
    %1302 = vmatprep.subr.bf16.mxu0 %v1100
    %1303 = vmatpush1.bf16.msra.mxu0 %v1099
    %1304 = vmatprep.subr.bf16.mxu0 %v1102
    %1305 = vmatpush1.bf16.msra.mxu0 %v1101
    %1306 = vmatprep.mubr.bf16.mxu0 %v640
    %1307 = vmatmul.mubr.bf16.gmra.mrb[0].mxu0 %v639
    %v1308 = vpop.f32.mrb[0].mxu0
    %v1309 = vadd.f32 %v1266, %v1308
    %v1310 = vpop.f32.mrb[0].mxu0
    %v1311 = vadd.f32 %v1268, %v1310
    %v1312 = vpop.f32.mrb[0].mxu0
    %v1313 = vadd.f32 %v1270, %v1312
    %v1314 = vpop.f32.mrb[0].mxu0
    %v1315 = vadd.f32 %v1272, %v1314
    %1316 = vdwg.mxu0
    %1317 = vmatprep.subr.bf16.mxu0 %v1104
    %1318 = vmatpush1.bf16.msra.mxu0 %v1103
    %1319 = vmatprep.subr.bf16.mxu0 %v1106
    %1320 = vmatpush1.bf16.msra.mxu0 %v1105
    %1321 = vmatprep.subr.bf16.mxu0 %v1108
    %1322 = vmatpush1.bf16.msra.mxu0 %v1107
    %1323 = vmatprep.subr.bf16.mxu0 %v1110
    %1324 = vmatpush1.bf16.msra.mxu0 %v1109
    %1325 = vmatprep.subr.bf16.mxu0 %v1112
    %1326 = vmatpush1.bf16.msra.mxu0 %v1111
    %1327 = vmatprep.subr.bf16.mxu0 %v1114
    %1328 = vmatpush1.bf16.msra.mxu0 %v1113
    %1329 = vmatprep.subr.bf16.mxu0 %v1116
    %1330 = vmatpush1.bf16.msra.mxu0 %v1115
    %1331 = vmatprep.subr.bf16.mxu0 %v1118
    %1332 = vmatpush1.bf16.msra.mxu0 %v1117
    %1333 = vmatprep.subr.bf16.mxu0 %v1120
    %1334 = vmatpush1.bf16.msra.mxu0 %v1119
    %1335 = vmatprep.subr.bf16.mxu0 %v1122
    %1336 = vmatpush1.bf16.msra.mxu0 %v1121
    %1337 = vmatprep.subr.bf16.mxu0 %v1124
    %1338 = vmatpush1.bf16.msra.mxu0 %v1123
    %1339 = vmatprep.subr.bf16.mxu0 %v1126
    %1340 = vmatpush1.bf16.msra.mxu0 %v1125
    %1341 = vmatprep.subr.bf16.mxu0 %v1128
    %1342 = vmatpush1.bf16.msra.mxu0 %v1127
    %1343 = vmatprep.subr.bf16.mxu0 %v1130
    %1344 = vmatpush1.bf16.msra.mxu0 %v1129
    %1345 = vmatprep.subr.bf16.mxu0 %v1132
    %1346 = vmatpush1.bf16.msra.mxu0 %v1131
    %1347 = vmatprep.subr.bf16.mxu0 %v1134
    %1348 = vmatpush1.bf16.msra.mxu0 %v1133
    %1349 = vmatprep.mubr.bf16.mxu0 %v642
    %1350 = vmatmul.mubr.bf16.gmra.mrb[0].mxu0 %v641
    %v1351 = vpop.f32.mrb[0].mxu0
    %v1352 = vadd.f32 %v1309, %v1351
    %v1353 = vpop.f32.mrb[0].mxu0
    %v1354 = vadd.f32 %v1311, %v1353
    %v1355 = vpop.f32.mrb[0].mxu0
    %v1356 = vadd.f32 %v1313, %v1355
    %v1357 = vpop.f32.mrb[0].mxu0
    %v1358 = vadd.f32 %v1315, %v1357
    %1359 = vdwg.mxu0
    %1360 = vst [vmem:[#allocation2] sm:$0xff] %v1352
    %1361 = vst.msk [vmem:[#allocation2 + $0x8] sm:$0xff] %vm492, %v1354
    %1362 = vst [vmem:[#allocation2 + $0x10] sm:$0xff] %v1356
    %1363 = vst.msk [vmem:[#allocation2 + $0x18] sm:$0xff] %vm492, %v1358
    // Predicated region
    $region22: #{tpu_custom_call.1} parent=1 // pred_check
      _
    $region23: #{tpu_custom_call.1} parent=1 // pred_check_branch
      %1365 = sbr.rel (0) target = $region25
    $region24: #{tpu_custom_call.1} parent=1 // pred_region
      %s1367 = ssub.s32 512, 512
      %1368 = vsyncadd [#allocation3], %s1367
      %s1369 = sshll.u32 [#allocation2], 4
      %s1370 = int_to_ptr.vmem [resolvable:$true] %s1369
      %1375 = dma.vmem_to_hbm [thread:$0]  %s1370, 512, %s5, [#allocation3], 256, 256, 16
    $region25: #{tpu_custom_call.1} parent=1 // pred_fallthru
      _
    // Predicated region
    $region26: #{tpu_custom_call.1} parent=1 // pred_check
      _
    $region27: #{tpu_custom_call.1} parent=1 // pred_check_branch
      %1377 = sbr.rel (0) target = $region29
    $region28: #{tpu_custom_call.1} parent=1 // pred_region
      %1378 = dma.done [#allocation3], 512
    $region29: #{tpu_custom_call.1} parent=1 // pred_fallthru
      _
    %1379 = vsyncpa [#allocation3], 1

</llo_original>
